<compile_context>
chip_gen: v6e
topology: v6e:2x2x1
jax: 0.10.0
libtpu: 0.0.40
codegen_flags: <defaults>
</compile_context>

<pallas_src>
import jax
import jax.numpy as jnp
from jax.experimental import pallas as pl
from jax.experimental.pallas import tpu as pltpu


def _attention_kernel(x_ref, w_ref, b_ref, o_ref):
    x = x_ref[...]            # (TB, F)  f32 activation tile
    w = w_ref[...]            # (F, F)   bf16 weight, already (in_features, out_features)
    b = b_ref[...]            # (1, F)   f32 bias row

    # Linear: standard (TB,K)x(K,N) MXU contraction, bf16 operands, f32 accumulation.
    logits = jnp.dot(x.astype(jnp.bfloat16), w,
                     preferred_element_type=jnp.float32) + b

    # Numerically stable softmax over the feature axis (dim=1), all in f32.
    m = jnp.max(logits, axis=1, keepdims=True)
    e = jnp.exp(logits - m)
    denom = jnp.sum(e, axis=1, keepdims=True)
    att = e * pl.reciprocal(denom, approx=True)   # EUP slot, effectively free

    # Elementwise gate with the original (un-cast) f32 activations.
    o_ref[...] = (x * att).astype(o_ref.dtype)


def _vmem_capacity_bytes():
    try:
        return int(pltpu.get_tpu_info().vmem_capacity_bytes)
    except Exception:  # fall back to the most conservative (v7x per-TC) figure
        return 64 * 1024 * 1024


def _const_block_spec(shape):
    """Constant-index BlockSpec; single-buffered when the JAX version supports it."""
    index_map = lambda i: (0,) * len(shape)
    try:
        return pl.BlockSpec(shape, index_map, pipeline_mode=pl.Buffered(1))
    except Exception:  # older JAX without pipeline_mode / Buffered
        return pl.BlockSpec(shape, index_map)


def attention_layer(x, weight, bias):
    """x: (B, F) f32; weight: (F, F) f32 in PyTorch (out, in) layout; bias: (F,) f32."""
    B, f_in = x.shape
    f_out, f_in_w = weight.shape
    assert f_in_w == f_in
    assert f_out == f_in, "gate x * softmax(fc(x)) requires out_features == in_features"

    # One-off wrapper-side weight prep: transpose to (in, out) and cast to bf16 so the
    # kernel never re-casts or relayouts the resident weight.
    w_t = weight.T.astype(jnp.bfloat16)               # (f_in, f_out)
    b2 = bias.reshape(1, f_out).astype(jnp.float32)   # (1, f_out)

    # --- VMEM budget (generation aware) -------------------------------------------------
    vmem_cap = _vmem_capacity_bytes()
    vmem_budget = int(vmem_cap * 0.85)                # headroom for Mosaic internal scratch
    w_bytes = f_in * f_out * 2                        # bf16, single-buffered
    b_bytes = f_out * 4

    # --- batch tile: fill VMEM (target ~4 MiB x tile), rows a multiple of 8 -------------
    row_bytes = f_in * 4
    avail = max(vmem_budget - w_bytes - b_bytes - (4 << 20), 1 << 20)
    tb = min((4 << 20) // row_bytes,                  # ~4 MiB x tile target
             avail // (4 * row_bytes))                # 2x in + 2x out double-buffering
    tb = max(8, (tb // 8) * 8)
    if tb >= B:
        tb = B                                        # single full-batch block
    grid = (pl.cdiv(B, tb),)

    tile_bytes = tb * f_in * 4
    vmem_limit = min(vmem_budget, 4 * tile_bytes + w_bytes + b_bytes + (4 << 20))
    vmem_limit = max(int(vmem_limit), 16 << 20)

    return pl.pallas_call(
        _attention_kernel,
        out_shape=jax.ShapeDtypeStruct((B, f_out), x.dtype),
        grid_spec=pltpu.PrefetchScalarGridSpec(
            num_scalar_prefetch=0,
            grid=grid,
            in_specs=[
                pl.BlockSpec((tb, f_in), lambda i: (i, 0)),   # x: pipelined over batch
                _const_block_spec((f_in, f_out)),             # weight: VMEM-resident
                _const_block_spec((1, f_out)),                # bias: VMEM-resident
            ],
            out_specs=pl.BlockSpec((tb, f_out), lambda i: (i, 0)),
        ),
        compiler_params=pltpu.CompilerParams(
            dimension_semantics=("parallel",),   # batch rows independent (megacore-shardable)
            vmem_limit_bytes=vmem_limit,
        ),
    )(x, w_t, b2)


def _reference(x, weight, bias):
    logits = x @ weight.T + bias
    att = jax.nn.softmax(logits, axis=1)
    return x * att


if __name__ == "__main__":
    key = jax.random.PRNGKey(0)
    k_x, k_w, k_b = jax.random.split(key, 3)

    batch, features = 8, 32            # in_features == out_features == 32
    x = jax.random.normal(k_x, (batch, features), dtype=jnp.float32)
    # Deterministic synthetic parameters (stand-in for nn.Linear init).
    weight = jax.random.normal(k_w, (features, features), dtype=jnp.float32) * 0.1
    bias = jax.random.normal(k_b, (features,), dtype=jnp.float32) * 0.1

    out = attention_layer(x, weight, bias)
    jax.block_until_ready(out)

    ref = _reference(x, weight, bias)
    assert out.shape == (batch, features)
    # bf16 MXU operands + approx reciprocal -> relaxed tolerance vs the pure-f32 reference.
    assert jnp.allclose(out, ref, atol=1e-2, rtol=1e-2), "mismatch vs pure-JAX reference"

    print("KERNEL_OK")
</pallas_src>

<mosaic_0001>
module attributes {stable_mosaic.version = 11 : i64} {
  func.func @_attention_kernel(%arg0: i32, %arg1: memref<8x32xf32, #tpu.memory_space<vmem>>, %arg2: memref<32x32xbf16, #tpu.memory_space<vmem>>, %arg3: memref<1x32xf32, #tpu.memory_space<vmem>>, %arg4: memref<8x32xf32, #tpu.memory_space<vmem>>) attributes {dimension_semantics = [#tpu.dimension_semantics<parallel>], iteration_bounds = array<i64: 1>, scalar_prefetch = 0 : i64, scratch_operands = 0 : i64, tpu.core_type = #tpu.core_type<tc>, window_params = [{transform_indices = @transform_0, window_bounds = array<i64: 8, 32>}, {pipeline_mode = #tpu.pipeline_mode<synchronous>, transform_indices = @transform_1, window_bounds = array<i64: 32, 32>}, {pipeline_mode = #tpu.pipeline_mode<synchronous>, transform_indices = @transform_2, window_bounds = array<i64: 1, 32>}, {transform_indices = @transform_3, window_bounds = array<i64: 8, 32>}]} {
    %c0 = arith.constant 0 : index
    %c0_0 = arith.constant 0 : index
    %0 = vector.load %arg1[%c0, %c0_0] : memref<8x32xf32, #tpu.memory_space<vmem>>, vector<8x32xf32>
    %c0_1 = arith.constant 0 : index
    %c0_2 = arith.constant 0 : index
    %1 = vector.load %arg2[%c0_1, %c0_2] : memref<32x32xbf16, #tpu.memory_space<vmem>>, vector<32x32xbf16>
    %c0_3 = arith.constant 0 : index
    %c0_4 = arith.constant 0 : index
    %2 = vector.load %arg3[%c0_3, %c0_4] : memref<1x32xf32, #tpu.memory_space<vmem>>, vector<1x32xf32>
    %3 = arith.truncf %0 : vector<8x32xf32> to vector<8x32xbf16>
    %cst = arith.constant dense<0.000000e+00> : vector<8x32xf32>
    %4 = tpu.matmul %3, %1, %cst {dimension_numbers = #tpu.dot_dimension_numbers<[1], [0], [0], [1], [0, 0, 1, 1], [], []>} : vector<8x32xbf16>, vector<32x32xbf16>, vector<8x32xf32> -> vector<8x32xf32>
    %5 = vector.broadcast %2 : vector<1x32xf32> to vector<8x32xf32>
    %6 = arith.addf %4, %5 : vector<8x32xf32>
    %cst_5 = arith.constant dense<0xFF800000> : vector<8xf32>
    %7 = vector.multi_reduction <maximumf>, %6, %cst_5 [1] : vector<8x32xf32> to vector<8xf32>
    %8 = vector.shape_cast %7 : vector<8xf32> to vector<8x1xf32>
    %9 = vector.broadcast %8 : vector<8x1xf32> to vector<8x32xf32>
    %10 = arith.subf %6, %9 : vector<8x32xf32>
    %11 = math.exp %10 : vector<8x32xf32>
    %cst_6 = arith.constant dense<0.000000e+00> : vector<8xf32>
    %12 = vector.multi_reduction <add>, %11, %cst_6 [1] : vector<8x32xf32> to vector<8xf32>
    %13 = vector.shape_cast %12 : vector<8xf32> to vector<8x1xf32>
    %14 = tpu.reciprocal %13 {approx = true} : vector<8x1xf32> -> vector<8x1xf32>
    %15 = vector.broadcast %14 : vector<8x1xf32> to vector<8x32xf32>
    %16 = arith.mulf %11, %15 : vector<8x32xf32>
    %17 = arith.mulf %0, %16 : vector<8x32xf32>
    %c0_7 = arith.constant 0 : index
    %c0_8 = arith.constant 0 : index
    %18 = vector.load %arg4[%c0_7, %c0_8] : memref<8x32xf32, #tpu.memory_space<vmem>>, vector<8x32xf32>
    tpu.vector_store %arg4[%c0_7, %c0_8], %17 {strides = array<i32>} : memref<8x32xf32, #tpu.memory_space<vmem>>, vector<8x32xf32>,
    return
  }
  func.func @transform_0(%arg0: i32) -> (i32, i32) {
    %c0_i32 = arith.constant 0 : i32
    %c0_i32_0 = arith.constant 0 : i32
    return %arg0, %c0_i32 : i32, i32
  }
  func.func @transform_1(%arg0: i32) -> (i32, i32) {
    %c0_i32 = arith.constant 0 : i32
    %c0_i32_0 = arith.constant 0 : i32
    %c0_i32_1 = arith.constant 0 : i32
    return %c0_i32, %c0_i32_0 : i32, i32
  }
  func.func @transform_2(%arg0: i32) -> (i32, i32) {
    %c0_i32 = arith.constant 0 : i32
    %c0_i32_0 = arith.constant 0 : i32
    %c0_i32_1 = arith.constant 0 : i32
    return %c0_i32, %c0_i32_0 : i32, i32
  }
  func.func @transform_3(%arg0: i32) -> (i32, i32) {
    %c0_i32 = arith.constant 0 : i32
    %c0_i32_0 = arith.constant 0 : i32
    return %arg0, %c0_i32 : i32, i32
  }
}

</mosaic_0001>

<llo_original>
// kernel: tpu_custom_call.1
$region0: #{tpu_custom_call.1}
  #allocation0 [shape = 'u32[]', space=smem, size = 0x4, offset = 0x4, fixed_abs, tag = 'smem constant byte address 0x4 - core index']
  #allocation1 [shape = 'u32[144,128]{1,0:T(1,128)}', space=vmem, size = 0x12000, scoped, tag = 'internal scratch']
  %s0 = inlined_call_operand.hbm [shape: f32[8,32], index: 0, kind: input, shape index: {}]
  %s1 = inlined_call_operand.hbm [shape: bf16[32,32], index: 1, kind: input, shape index: {}]
  %s2 = inlined_call_operand.vmem [shape: f32[1,32], index: 2, kind: input, shape index: {}]
  %s3 = inlined_call_operand.hbm [shape: f32[8,32], index: 3, kind: output, shape index: {}]
  %s4 = sld [smem:[#allocation0]]
  $region30: #{tpu_custom_call.1} parent=0
    _
  %s6 = ssub.s32 1, %s4
  %s7 = scalar_select 0, %s6, %s4
  $region1: #{tpu_custom_call.1} parent=0
    #allocation2 [shape = 'u8[4096]{0}', space=vmem, size = 0x1000, scoped, tag = 'input window, operand 0, single buffered']
    #allocation3 [shape = 's32[1]{0}', space=sflag, size = 0x4, scoped, tag = 'scoped memory for tpu_custom_call.1']
    #allocation4 [shape = 's32[1]{0}', space=sflag, size = 0x4, scoped, tag = 'scoped memory for tpu_custom_call.1']
    #allocation5 [shape = 'u8[8192]{0}', space=vmem, size = 0x2000, scoped, tag = 'input window, operand 1, single buffered']
    #allocation6 [shape = 's32[1]{0}', space=sflag, size = 0x4, scoped, tag = 'scoped memory for tpu_custom_call.1']
    #allocation7 [shape = 'u8[4096]{0}', space=vmem, size = 0x1000, scoped, tag = 'output window, operand 0, single buffered']
    %8 = vsyncpa [#allocation3], 0
    %9 = vsyncpa [#allocation6], 0
    %10 = vsyncpa [#allocation4], 0
    // Predicated region
    $region2: #{tpu_custom_call.1} parent=1 // pred_check
      _
    $region3: #{tpu_custom_call.1} parent=1 // pred_check_branch
      %12 = sbr.rel (0) target = $region5
    $region4: #{tpu_custom_call.1} parent=1 // pred_region
      %s14 = ssub.s32 128, 128
      %15 = vsyncadd [#allocation3], %s14
      %s17 = sshll.u32 [#allocation2], 4
      %s18 = int_to_ptr.vmem [resolvable:$true] %s17
      %20 = dma.hbm_to_vmem [thread:$0]  %s0, 128, %s18, [#allocation3]
    $region5: #{tpu_custom_call.1} parent=1 // pred_fallthru
      _
    // Predicated region
    $region6: #{tpu_custom_call.1} parent=1 // pred_check
      _
    $region7: #{tpu_custom_call.1} parent=1 // pred_check_branch
      %22 = sbr.rel (0) target = $region9
    $region8: #{tpu_custom_call.1} parent=1 // pred_region
      %s24 = ssub.s32 256, 256
      %25 = vsyncadd [#allocation6], %s24
      %s26 = sshll.u32 [#allocation5], 4
      %s27 = int_to_ptr.vmem [resolvable:$true] %s26
      %32 = dma.hbm_to_vmem [thread:$0]  %s1, 256, %s27, [#allocation6], 64, 64, 4
    $region9: #{tpu_custom_call.1} parent=1 // pred_fallthru
      _
    // Predicated region
    $region10: #{tpu_custom_call.1} parent=1 // pred_check
      _
    $region11: #{tpu_custom_call.1} parent=1 // pred_check_branch
      %34 = sbr.rel (0) target = $region13
    $region12: #{tpu_custom_call.1} parent=1 // pred_region
      _
    $region13: #{tpu_custom_call.1} parent=1 // pred_fallthru
      _
    // Predicated region
    $region14: #{tpu_custom_call.1} parent=1 // pred_check
      _
    $region15: #{tpu_custom_call.1} parent=1 // pred_check_branch
      %36 = sbr.rel (0) target = $region17
    $region16: #{tpu_custom_call.1} parent=1 // pred_region
      %37 = dma.done [#allocation3], 128
    $region17: #{tpu_custom_call.1} parent=1 // pred_fallthru
      _
    // Predicated region
    $region18: #{tpu_custom_call.1} parent=1 // pred_check
      _
    $region19: #{tpu_custom_call.1} parent=1 // pred_check_branch
      %39 = sbr.rel (0) target = $region21
    $region20: #{tpu_custom_call.1} parent=1 // pred_region
      %40 = dma.done [#allocation6], 256
    $region21: #{tpu_custom_call.1} parent=1 // pred_fallthru
      _
    %v42 = vld [vmem:[#allocation2] sm:$0xff]
    %v43 = vld [vmem:[#allocation5] sm:$0xf]
    %v44 = vld [vmem:[#allocation5 + $0x4] sm:$0xf]
    %v45 = vld [vmem:[#allocation5 + $0x8] sm:$0xf]
    %v46 = vld [vmem:[#allocation5 + $0xc] sm:$0xf]
    %v47 = vld [vmem:[%s2] sm:$0x1]
    %v48 = vpack.c.bf16 %v42, %v42
    %v50 = vlaneseq
    %v51 = vshrl.u32 %v50, 7
    %v52 = vsub.s32 0, %v51
    %v53 = vrot.slane %v47, %v52
    %v59 = vunpack.c.l.b16 %v43
    %v60 = vunpack.c.l.b16 %v44
    %v61 = vunpack.c.l.b16 %v45
    %v62 = vunpack.c.l.b16 %v46
    %v63 = vpack.c.b16 %v60, %v59
    %v64 = vpack.c.b16 %v62, %v61
    %vm67 = vcmask 261120
    %v69 = vsel %vm67, %v48, 0
    %71 = vmatprep.subr.bf16.mxu0 0
    %72 = vmatpush1.bf16.msra.mxu0 0
    %73 = vmatprep.subr.bf16.mxu0 0
    %74 = vmatpush1.bf16.msra.mxu0 0
    %75 = vmatprep.subr.bf16.mxu0 0
    %76 = vmatpush1.bf16.msra.mxu0 0
    %77 = vmatprep.subr.bf16.mxu0 0
    %78 = vmatpush1.bf16.msra.mxu0 0
    %79 = vmatprep.subr.bf16.mxu0 0
    %80 = vmatpush1.bf16.msra.mxu0 0
    %81 = vmatprep.subr.bf16.mxu0 0
    %82 = vmatpush1.bf16.msra.mxu0 0
    %83 = vmatprep.subr.bf16.mxu0 0
    %84 = vmatpush1.bf16.msra.mxu0 %v64
    %85 = vmatprep.subr.bf16.mxu0 0
    %86 = vmatpush1.bf16.msra.mxu0 %v63
    %87 = vmatprep.subr.bf16.mxu0 0
    %88 = vmatpush2.bf16.msra.mxu0 0
    %89 = vmatprep.subr.bf16.mxu0 0
    %90 = vmatpush2.bf16.msra.mxu0 0
    %91 = vmatprep.subr.bf16.mxu0 0
    %92 = vmatpush2.bf16.msra.mxu0 0
    %93 = vmatprep.subr.bf16.mxu0 0
    %94 = vmatpush2.bf16.msra.mxu0 0
    %95 = vmatprep.subr.bf16.mxu0 0
    %96 = vmatpush2.bf16.msra.mxu0 0
    %97 = vmatprep.subr.bf16.mxu0 0
    %98 = vmatpush2.bf16.msra.mxu0 0
    %99 = vmatprep.subr.bf16.mxu0 0
    %100 = vmatpush2.bf16.msra.mxu0 0
    %101 = vmatprep.subr.bf16.mxu0 0
    %102 = vmatpush2.bf16.msra.mxu0 0
    %103 = vmatprep.mubr.bf16.mxu0 0
    %104 = vmatmul.mubr.bf16.gmra.mxu0 %v69
    %v105 = vpop.f32.mrf.mxu0
    %v106 = vadd.f32 %v53, %v105
    %v107 = vpop.f32.mrf.mxu0
    %v108 = vpop.f32.mrf.mxu0
    %v109 = vpop.f32.mrf.mxu0
    %110 = vdwg.mxu0
    %v111 = vsel %vm67, %v106, -inf
    %112 = vmax.xlane.f32.xlu0 %v111
    %v113 = vpop.xlane.xlu0 %112
    %v114 = vsub.f32 %v106, %v113
    %v115 = vmul.f32 %v114, 1.442695
    %v116 = vpow.pop %v115
    %v117 = vsel %vm67, %v116, 0.0
    %118 = vadd.xlane.f32.xlu0 %v117
    %v119 = vpop.xlane.xlu0 %118
    %v120 = vrcp.pop %v119
    %v121 = vmul.f32 %v116, %v120
    %v122 = vmul.f32 %v42, %v121
    %123 = vst.msk [vmem:[#allocation7] sm:$0xff] %vm67, %v122
    // Predicated region
    $region22: #{tpu_custom_call.1} parent=1 // pred_check
      _
    $region23: #{tpu_custom_call.1} parent=1 // pred_check_branch
      %125 = sbr.rel (0) target = $region25
    $region24: #{tpu_custom_call.1} parent=1 // pred_region
      %s127 = ssub.s32 128, 128
      %128 = vsyncadd [#allocation4], %s127
      %s130 = sshll.u32 [#allocation7], 4
      %s131 = int_to_ptr.vmem [resolvable:$true] %s130
      %133 = dma.vmem_to_hbm [thread:$0]  %s131, 128, %s3, [#allocation4]
    $region25: #{tpu_custom_call.1} parent=1 // pred_fallthru
      _
    // Predicated region
    $region26: #{tpu_custom_call.1} parent=1 // pred_check
      _
    $region27: #{tpu_custom_call.1} parent=1 // pred_check_branch
      %135 = sbr.rel (0) target = $region29
    $region28: #{tpu_custom_call.1} parent=1 // pred_region
      %136 = dma.done [#allocation4], 128
    $region29: #{tpu_custom_call.1} parent=1 // pred_fallthru
      _
    %137 = vsyncpa [#allocation3], 1
    %138 = vsyncpa [#allocation6], 1
    %139 = vsyncpa [#allocation4], 1

</llo_original>
